<compile_context>
chip_gen: v6e
topology: v6e:2x2x1
jax: 0.10.0
libtpu: 0.0.40
codegen_flags: <defaults>
</compile_context>

<pallas_src>
from functools import partial

import numpy as np
import jax
import jax.numpy as jnp
from jax.experimental import pallas as pl
from jax.experimental.pallas import tpu as pltpu


# ----------------------------- parameter setup -----------------------------

def _round_up(x: int, m: int) -> int:
    return ((x + m - 1) // m) * m


def calculate_num_tapers(n_fft: int, sample_rate: float, frequency_resolution: float):
    window_size_seconds = n_fft / sample_rate
    time_halfbandwidth_product = max(window_size_seconds * frequency_resolution, 1)
    num_tapers = int(2 * time_halfbandwidth_product - 1)
    return int(time_halfbandwidth_product), num_tapers


def dpss_windows(N: int, NW: float, Kmax: int) -> np.ndarray:
    """Deterministic DPSS tapers via eigen-decomposition of the tridiagonal
    commuting matrix (same construction scipy uses). Returns (Kmax, N) f64."""
    W = NW / float(N)
    n = np.arange(N, dtype=np.float64)
    diag = ((N - 1 - 2.0 * n) / 2.0) ** 2 * np.cos(2.0 * np.pi * W)
    off = n[1:] * (N - n[1:]) / 2.0
    A = np.diag(diag) + np.diag(off, 1) + np.diag(off, -1)
    eigvals, eigvecs = np.linalg.eigh(A)
    order = np.argsort(eigvals)[::-1][:Kmax]
    tapers = eigvecs[:, order].T.copy()  # (Kmax, N), unit L2 norm
    # Deterministic sign convention (sign is irrelevant for the power spectrum):
    for k in range(Kmax):
        s = tapers[k].sum()
        ref = s if abs(s) > 1e-12 else tapers[k][np.argmax(np.abs(tapers[k]))]
        if ref < 0:
            tapers[k] = -tapers[k]
    return tapers


def build_shared_basis(n_fft: int, n_fft_pad: int, n_freq: int, n_freq_pad: int) -> np.ndarray:
    """Shared (taper-free) onesided DFT basis W = [cos | -sin], zero-padded to
    (n_fft_pad, 2*n_freq_pad). Padding the contraction rows / freq columns with
    zeros is numerically exact."""
    n = np.arange(n_fft, dtype=np.float64)[:, None]           # (n_fft, 1)
    f = np.arange(n_freq, dtype=np.float64)[None, :]           # (1, n_freq)
    ang = 2.0 * np.pi * n * f / float(n_fft)
    cos_b = np.zeros((n_fft_pad, n_freq_pad), np.float64)
    sin_b = np.zeros((n_fft_pad, n_freq_pad), np.float64)
    cos_b[:n_fft, :n_freq] = np.cos(ang)
    sin_b[:n_fft, :n_freq] = -np.sin(ang)
    w = np.concatenate([cos_b, sin_b], axis=1)                 # (n_fft_pad, 2*n_freq_pad)
    return w.astype(np.float32)


# ------------------------------ Pallas kernel -------------------------------

def _mts_kernel(frames_ref, tapers_ref, w_ref, o_ref, acc_ref, *,
                num_tapers: int, n_freq_pad: int):
    """One M-tile per grid step (grid axis 0 is 'parallel').

    frames_ref: (tm, n_fft_pad)            bf16  frame rows for this tile
    tapers_ref: (K, n_fft_pad)             bf16  all DPSS tapers (resident)
    w_ref     : (n_fft_pad, 2*n_freq_pad)  bf16  shared [cos | -sin] basis (resident)
    o_ref     : (tm, n_freq_pad)           f32   lane-dense output tile
    acc_ref   : (tm, n_freq_pad)           f32   VMEM scratch accumulator
    """
    f = frames_ref[...]                      # (tm, n_fft_pad) bf16
    w = w_ref[...]                           # (n_fft_pad, 2*n_freq_pad) bf16
    taps = tapers_ref[...]                   # (K, n_fft_pad) bf16

    acc_ref[...] = jnp.zeros_like(acc_ref)

    # Unrolled taper reduction: VPU broadcast-multiply + one wide MXU matmul
    # per taper; the RHS stays resident across all tapers and all grid steps.
    for k in range(num_tapers):
        taper_k = taps[k:k + 1, :]                                   # (1, n_fft_pad)
        fk = f * taper_k                                             # bf16, VPU filler
        y = jnp.dot(fk, w, preferred_element_type=jnp.float32)       # (tm, 2*n_freq_pad) f32
        re = y[:, :n_freq_pad]
        im = y[:, n_freq_pad:]
        acc_ref[...] += re * re + im * im

    o_ref[...] = acc_ref[...] * (1.0 / num_tapers)


# ------------------------------ host wrapper --------------------------------

def multitaper_spectrogram(x: jnp.ndarray, sample_rate: int, n_fft: int,
                           frequency_resolution: float = 1.0) -> jnp.ndarray:
    """x: (B, C, T) or (C, T) float32 -> (B, C, n_freq, n_frames) (or no batch dim)."""
    squeeze_batch = x.ndim == 2
    if squeeze_batch:
        x = x[None]
    B, C, T = x.shape

    win_length = n_fft
    hop_length = win_length // 2
    n_freq = n_fft // 2 + 1
    n_frames = T // hop_length + 1            # center=True, pad=0

    NW, num_tapers = calculate_num_tapers(n_fft, sample_rate, frequency_resolution)
    tapers_np = dpss_windows(n_fft, float(NW), num_tapers)            # (K, n_fft) f64

    # Padded (lane-dense) dimensions.
    n_fft_pad = _round_up(n_fft, 128)
    n_freq_pad = _round_up(n_freq, 128)

    w_np = build_shared_basis(n_fft, n_fft_pad, n_freq, n_freq_pad)   # (n_fft_pad, 2*n_freq_pad)
    taps_np = np.zeros((num_tapers, n_fft_pad), np.float32)
    taps_np[:, :n_fft] = tapers_np
    w = jnp.asarray(w_np, dtype=jnp.bfloat16)
    taps = jnp.asarray(taps_np, dtype=jnp.bfloat16)

    # --- glue: center reflect-pad + frame extraction (pure indexing) ---
    # TODO(synk): for memory-bound configs, build overlapping windows inside the
    # kernel from a pl.ANY signal ref to avoid the 2x frame duplication.
    pad = n_fft // 2
    xp = jnp.pad(x, ((0, 0), (0, 0), (pad, pad)), mode="reflect")     # (B, C, T + 2*pad)
    starts = jnp.arange(n_frames) * hop_length                        # (n_frames,)
    gather_idx = starts[:, None] + jnp.arange(n_fft)[None, :]          # (n_frames, n_fft)
    frames = xp[:, :, gather_idx]                                      # (B, C, n_frames, n_fft)
    M = B * C * n_frames
    frames2d = frames.reshape(M, n_fft).astype(jnp.float32)            # (M, n_fft)

    # --- M tiling: parallel grid axis over row tiles ---
    tm = min(512, _round_up(M, 8))
    M_pad = _round_up(M, tm)
    frames2d = jnp.pad(frames2d, ((0, M_pad - M), (0, n_fft_pad - n_fft)))
    frames2d = frames2d.astype(jnp.bfloat16)                           # (M_pad, n_fft_pad)
    grid_m = M_pad // tm
    K = num_tapers

    kernel = partial(_mts_kernel, num_tapers=K, n_freq_pad=n_freq_pad)

    flops = 2 * K * M_pad * n_fft_pad * (2 * n_freq_pad) + 4 * K * M_pad * n_freq_pad
    bytes_accessed = (M_pad * n_fft_pad * 2            # frames (bf16)
                      + K * n_fft_pad * 2              # tapers (bf16)
                      + n_fft_pad * 2 * n_freq_pad * 2  # shared basis (bf16)
                      + M_pad * n_freq_pad * 4)         # output (f32)

    out2d = pl.pallas_call(
        kernel,
        out_shape=jax.ShapeDtypeStruct((M_pad, n_freq_pad), jnp.float32),
        grid_spec=pltpu.PrefetchScalarGridSpec(
            num_scalar_prefetch=0,
            grid=(grid_m,),
            in_specs=[
                pl.BlockSpec((tm, n_fft_pad), lambda i: (i, 0)),
                pl.BlockSpec((K, n_fft_pad), lambda i: (0, 0)),
                pl.BlockSpec((n_fft_pad, 2 * n_freq_pad), lambda i: (0, 0)),
            ],
            out_specs=pl.BlockSpec((tm, n_freq_pad), lambda i: (i, 0)),
            scratch_shapes=[pltpu.VMEM((tm, n_freq_pad), jnp.float32)],
        ),
        compiler_params=pltpu.CompilerParams(
            dimension_semantics=("parallel",),
            vmem_limit_bytes=48 * 1024 * 1024,
        ),
        cost_estimate=pl.CostEstimate(
            flops=int(flops), transcendentals=0, bytes_accessed=int(bytes_accessed)),
    )(frames2d, taps, w)

    out = out2d[:M, :n_freq].reshape(B, C, n_frames, n_freq).transpose(0, 1, 3, 2)
    if squeeze_batch:
        out = out[0]
    return out


# --------------------------- pure-numpy reference ----------------------------

def reference_numpy(x_np: np.ndarray, tapers: np.ndarray, n_fft: int) -> np.ndarray:
    """f64 reference: mean over tapers of |rfft(frame * taper)|^2."""
    hop = n_fft // 2
    pad = n_fft // 2
    B, C, T = x_np.shape
    xp = np.pad(x_np.astype(np.float64), ((0, 0), (0, 0), (pad, pad)), mode="reflect")
    n_frames = T // hop + 1
    starts = np.arange(n_frames) * hop
    idx = starts[:, None] + np.arange(n_fft)[None, :]
    frames = xp[:, :, idx]                                            # (B, C, F, n_fft)
    wf = frames[:, :, :, None, :] * tapers[None, None, None, :, :]    # (B, C, F, K, n_fft)
    spec = np.fft.rfft(wf, axis=-1)                                   # (B, C, F, K, n_freq)
    power = (spec.real ** 2 + spec.imag ** 2).mean(axis=3)            # (B, C, F, n_freq)
    return power.transpose(0, 1, 3, 2).astype(np.float32)             # (B, C, n_freq, F)


# ---------------------------------- main ------------------------------------

if __name__ == "__main__":
    # Small, module-consistent shapes:
    #   sample_rate=16, n_fft=64, frequency_resolution=1.0
    #     -> NW=4, num_tapers=7, n_freq=33, hop=32
    #   x: (batch=2, channels=4, timesteps=128) -> n_frames = 128//32 + 1 = 5
    sample_rate = 16
    n_fft = 64
    B, C, T = 2, 4, 128

    key = jax.random.PRNGKey(0)
    x = jax.random.normal(key, (B, C, T), dtype=jnp.float32)

    out = multitaper_spectrogram(x, sample_rate=sample_rate, n_fft=n_fft,
                                 frequency_resolution=1.0)
    out = jax.block_until_ready(out)

    n_freq = n_fft // 2 + 1
    n_frames = T // (n_fft // 2) + 1
    assert out.shape == (B, C, n_freq, n_frames), out.shape
    assert out.dtype == jnp.float32
    assert bool(jnp.all(jnp.isfinite(out)))

    # Numerical check against an f64 FFT reference (bf16 MXU inputs -> lenient tol).
    NW, num_tapers = calculate_num_tapers(n_fft, sample_rate, 1.0)
    tapers = dpss_windows(n_fft, float(NW), num_tapers)
    ref = reference_numpy(np.asarray(x), tapers, n_fft)
    err = float(np.max(np.abs(np.asarray(out) - ref)))
    scale = float(np.max(np.abs(ref)))
    assert err <= 5e-2 * scale + 1e-3, (err, scale)

    print("KERNEL_OK")
</pallas_src>

<mosaic_0001>
module attributes {stable_mosaic.version = 11 : i64} {
  func.func @_mts_kernel(%arg0: i32, %arg1: memref<40x128xbf16, #tpu.memory_space<vmem>>, %arg2: memref<7x128xbf16, #tpu.memory_space<vmem>>, %arg3: memref<128x256xbf16, #tpu.memory_space<vmem>>, %arg4: memref<40x128xf32, #tpu.memory_space<vmem>>, %arg5: memref<40x128xf32, #tpu.memory_space<vmem>>) attributes {dimension_semantics = [#tpu.dimension_semantics<parallel>], iteration_bounds = array<i64: 1>, scalar_prefetch = 0 : i64, scratch_operands = 1 : i64, tpu.core_type = #tpu.core_type<tc>, window_params = [{transform_indices = @transform_0, window_bounds = array<i64: 40, 128>}, {pipeline_mode = #tpu.pipeline_mode<synchronous>, transform_indices = @transform_1, window_bounds = array<i64: 7, 128>}, {pipeline_mode = #tpu.pipeline_mode<synchronous>, transform_indices = @transform_2, window_bounds = array<i64: 128, 256>}, {transform_indices = @transform_3, window_bounds = array<i64: 40, 128>}]} {
    %c0 = arith.constant 0 : index
    %c0_0 = arith.constant 0 : index
    %0 = vector.load %arg1[%c0, %c0_0] : memref<40x128xbf16, #tpu.memory_space<vmem>>, vector<40x128xbf16>
    %c0_1 = arith.constant 0 : index
    %c0_2 = arith.constant 0 : index
    %1 = vector.load %arg3[%c0_1, %c0_2] : memref<128x256xbf16, #tpu.memory_space<vmem>>, vector<128x256xbf16>
    %c0_3 = arith.constant 0 : index
    %c0_4 = arith.constant 0 : index
    %2 = vector.load %arg2[%c0_3, %c0_4] : memref<7x128xbf16, #tpu.memory_space<vmem>>, vector<7x128xbf16>
    %cst = arith.constant 0.000000e+00 : f32
    %3 = vector.broadcast %cst : f32 to vector<40x128xf32>
    %c0_5 = arith.constant 0 : index
    %c0_6 = arith.constant 0 : index
    %4 = vector.load %arg5[%c0_5, %c0_6] : memref<40x128xf32, #tpu.memory_space<vmem>>, vector<40x128xf32>
    tpu.vector_store %arg5[%c0_5, %c0_6], %3 {strides = array<i32>} : memref<40x128xf32, #tpu.memory_space<vmem>>, vector<40x128xf32>,
    %5 = vector.extract_strided_slice %2 {offsets = [0, 0], sizes = [1, 128], strides = [1, 1]} : vector<7x128xbf16> to vector<1x128xbf16>
    %6 = vector.broadcast %5 : vector<1x128xbf16> to vector<40x128xbf16>
    %7 = arith.mulf %0, %6 : vector<40x128xbf16>
    %cst_7 = arith.constant dense<0.000000e+00> : vector<40x256xf32>
    %8 = tpu.matmul %7, %1, %cst_7 {dimension_numbers = #tpu.dot_dimension_numbers<[1], [0], [0], [1], [0, 0, 1, 1], [], []>} : vector<40x128xbf16>, vector<128x256xbf16>, vector<40x256xf32> -> vector<40x256xf32>
    %9 = vector.extract_strided_slice %8 {offsets = [0, 0], sizes = [40, 128], strides = [1, 1]} : vector<40x256xf32> to vector<40x128xf32>
    %10 = vector.extract_strided_slice %8 {offsets = [0, 128], sizes = [40, 128], strides = [1, 1]} : vector<40x256xf32> to vector<40x128xf32>
    %c0_8 = arith.constant 0 : index
    %c0_9 = arith.constant 0 : index
    %11 = vector.load %arg5[%c0_8, %c0_9] : memref<40x128xf32, #tpu.memory_space<vmem>>, vector<40x128xf32>
    %12 = arith.mulf %9, %9 : vector<40x128xf32>
    %13 = arith.mulf %10, %10 : vector<40x128xf32>
    %14 = arith.addf %12, %13 : vector<40x128xf32>
    %15 = arith.addf %11, %14 : vector<40x128xf32>
    %c0_10 = arith.constant 0 : index
    %c0_11 = arith.constant 0 : index
    %16 = vector.load %arg5[%c0_10, %c0_11] : memref<40x128xf32, #tpu.memory_space<vmem>>, vector<40x128xf32>
    tpu.vector_store %arg5[%c0_10, %c0_11], %15 {strides = array<i32>} : memref<40x128xf32, #tpu.memory_space<vmem>>, vector<40x128xf32>,
    %17 = vector.extract_strided_slice %2 {offsets = [1, 0], sizes = [1, 128], strides = [1, 1]} : vector<7x128xbf16> to vector<1x128xbf16>
    %18 = vector.broadcast %17 : vector<1x128xbf16> to vector<40x128xbf16>
    %19 = arith.mulf %0, %18 : vector<40x128xbf16>
    %cst_12 = arith.constant dense<0.000000e+00> : vector<40x256xf32>
    %20 = tpu.matmul %19, %1, %cst_12 {dimension_numbers = #tpu.dot_dimension_numbers<[1], [0], [0], [1], [0, 0, 1, 1], [], []>} : vector<40x128xbf16>, vector<128x256xbf16>, vector<40x256xf32> -> vector<40x256xf32>
    %21 = vector.extract_strided_slice %20 {offsets = [0, 0], sizes = [40, 128], strides = [1, 1]} : vector<40x256xf32> to vector<40x128xf32>
    %22 = vector.extract_strided_slice %20 {offsets = [0, 128], sizes = [40, 128], strides = [1, 1]} : vector<40x256xf32> to vector<40x128xf32>
    %c0_13 = arith.constant 0 : index
    %c0_14 = arith.constant 0 : index
    %23 = vector.load %arg5[%c0_13, %c0_14] : memref<40x128xf32, #tpu.memory_space<vmem>>, vector<40x128xf32>
    %24 = arith.mulf %21, %21 : vector<40x128xf32>
    %25 = arith.mulf %22, %22 : vector<40x128xf32>
    %26 = arith.addf %24, %25 : vector<40x128xf32>
    %27 = arith.addf %23, %26 : vector<40x128xf32>
    %c0_15 = arith.constant 0 : index
    %c0_16 = arith.constant 0 : index
    %28 = vector.load %arg5[%c0_15, %c0_16] : memref<40x128xf32, #tpu.memory_space<vmem>>, vector<40x128xf32>
    tpu.vector_store %arg5[%c0_15, %c0_16], %27 {strides = array<i32>} : memref<40x128xf32, #tpu.memory_space<vmem>>, vector<40x128xf32>,
    %29 = vector.extract_strided_slice %2 {offsets = [2, 0], sizes = [1, 128], strides = [1, 1]} : vector<7x128xbf16> to vector<1x128xbf16>
    %30 = vector.broadcast %29 : vector<1x128xbf16> to vector<40x128xbf16>
    %31 = arith.mulf %0, %30 : vector<40x128xbf16>
    %cst_17 = arith.constant dense<0.000000e+00> : vector<40x256xf32>
    %32 = tpu.matmul %31, %1, %cst_17 {dimension_numbers = #tpu.dot_dimension_numbers<[1], [0], [0], [1], [0, 0, 1, 1], [], []>} : vector<40x128xbf16>, vector<128x256xbf16>, vector<40x256xf32> -> vector<40x256xf32>
    %33 = vector.extract_strided_slice %32 {offsets = [0, 0], sizes = [40, 128], strides = [1, 1]} : vector<40x256xf32> to vector<40x128xf32>
    %34 = vector.extract_strided_slice %32 {offsets = [0, 128], sizes = [40, 128], strides = [1, 1]} : vector<40x256xf32> to vector<40x128xf32>
    %c0_18 = arith.constant 0 : index
    %c0_19 = arith.constant 0 : index
    %35 = vector.load %arg5[%c0_18, %c0_19] : memref<40x128xf32, #tpu.memory_space<vmem>>, vector<40x128xf32>
    %36 = arith.mulf %33, %33 : vector<40x128xf32>
    %37 = arith.mulf %34, %34 : vector<40x128xf32>
    %38 = arith.addf %36, %37 : vector<40x128xf32>
    %39 = arith.addf %35, %38 : vector<40x128xf32>
    %c0_20 = arith.constant 0 : index
    %c0_21 = arith.constant 0 : index
    %40 = vector.load %arg5[%c0_20, %c0_21] : memref<40x128xf32, #tpu.memory_space<vmem>>, vector<40x128xf32>
    tpu.vector_store %arg5[%c0_20, %c0_21], %39 {strides = array<i32>} : memref<40x128xf32, #tpu.memory_space<vmem>>, vector<40x128xf32>,
    %41 = vector.extract_strided_slice %2 {offsets = [3, 0], sizes = [1, 128], strides = [1, 1]} : vector<7x128xbf16> to vector<1x128xbf16>
    %42 = vector.broadcast %41 : vector<1x128xbf16> to vector<40x128xbf16>
    %43 = arith.mulf %0, %42 : vector<40x128xbf16>
    %cst_22 = arith.constant dense<0.000000e+00> : vector<40x256xf32>
    %44 = tpu.matmul %43, %1, %cst_22 {dimension_numbers = #tpu.dot_dimension_numbers<[1], [0], [0], [1], [0, 0, 1, 1], [], []>} : vector<40x128xbf16>, vector<128x256xbf16>, vector<40x256xf32> -> vector<40x256xf32>
    %45 = vector.extract_strided_slice %44 {offsets = [0, 0], sizes = [40, 128], strides = [1, 1]} : vector<40x256xf32> to vector<40x128xf32>
    %46 = vector.extract_strided_slice %44 {offsets = [0, 128], sizes = [40, 128], strides = [1, 1]} : vector<40x256xf32> to vector<40x128xf32>
    %c0_23 = arith.constant 0 : index
    %c0_24 = arith.constant 0 : index
    %47 = vector.load %arg5[%c0_23, %c0_24] : memref<40x128xf32, #tpu.memory_space<vmem>>, vector<40x128xf32>
    %48 = arith.mulf %45, %45 : vector<40x128xf32>
    %49 = arith.mulf %46, %46 : vector<40x128xf32>
    %50 = arith.addf %48, %49 : vector<40x128xf32>
    %51 = arith.addf %47, %50 : vector<40x128xf32>
    %c0_25 = arith.constant 0 : index
    %c0_26 = arith.constant 0 : index
    %52 = vector.load %arg5[%c0_25, %c0_26] : memref<40x128xf32, #tpu.memory_space<vmem>>, vector<40x128xf32>
    tpu.vector_store %arg5[%c0_25, %c0_26], %51 {strides = array<i32>} : memref<40x128xf32, #tpu.memory_space<vmem>>, vector<40x128xf32>,
    %53 = vector.extract_strided_slice %2 {offsets = [4, 0], sizes = [1, 128], strides = [1, 1]} : vector<7x128xbf16> to vector<1x128xbf16>
    %54 = vector.broadcast %53 : vector<1x128xbf16> to vector<40x128xbf16>
    %55 = arith.mulf %0, %54 : vector<40x128xbf16>
    %cst_27 = arith.constant dense<0.000000e+00> : vector<40x256xf32>
    %56 = tpu.matmul %55, %1, %cst_27 {dimension_numbers = #tpu.dot_dimension_numbers<[1], [0], [0], [1], [0, 0, 1, 1], [], []>} : vector<40x128xbf16>, vector<128x256xbf16>, vector<40x256xf32> -> vector<40x256xf32>
    %57 = vector.extract_strided_slice %56 {offsets = [0, 0], sizes = [40, 128], strides = [1, 1]} : vector<40x256xf32> to vector<40x128xf32>
    %58 = vector.extract_strided_slice %56 {offsets = [0, 128], sizes = [40, 128], strides = [1, 1]} : vector<40x256xf32> to vector<40x128xf32>
    %c0_28 = arith.constant 0 : index
    %c0_29 = arith.constant 0 : index
    %59 = vector.load %arg5[%c0_28, %c0_29] : memref<40x128xf32, #tpu.memory_space<vmem>>, vector<40x128xf32>
    %60 = arith.mulf %57, %57 : vector<40x128xf32>
    %61 = arith.mulf %58, %58 : vector<40x128xf32>
    %62 = arith.addf %60, %61 : vector<40x128xf32>
    %63 = arith.addf %59, %62 : vector<40x128xf32>
    %c0_30 = arith.constant 0 : index
    %c0_31 = arith.constant 0 : index
    %64 = vector.load %arg5[%c0_30, %c0_31] : memref<40x128xf32, #tpu.memory_space<vmem>>, vector<40x128xf32>
    tpu.vector_store %arg5[%c0_30, %c0_31], %63 {strides = array<i32>} : memref<40x128xf32, #tpu.memory_space<vmem>>, vector<40x128xf32>,
    %65 = vector.extract_strided_slice %2 {offsets = [5, 0], sizes = [1, 128], strides = [1, 1]} : vector<7x128xbf16> to vector<1x128xbf16>
    %66 = vector.broadcast %65 : vector<1x128xbf16> to vector<40x128xbf16>
    %67 = arith.mulf %0, %66 : vector<40x128xbf16>
    %cst_32 = arith.constant dense<0.000000e+00> : vector<40x256xf32>
    %68 = tpu.matmul %67, %1, %cst_32 {dimension_numbers = #tpu.dot_dimension_numbers<[1], [0], [0], [1], [0, 0, 1, 1], [], []>} : vector<40x128xbf16>, vector<128x256xbf16>, vector<40x256xf32> -> vector<40x256xf32>
    %69 = vector.extract_strided_slice %68 {offsets = [0, 0], sizes = [40, 128], strides = [1, 1]} : vector<40x256xf32> to vector<40x128xf32>
    %70 = vector.extract_strided_slice %68 {offsets = [0, 128], sizes = [40, 128], strides = [1, 1]} : vector<40x256xf32> to vector<40x128xf32>
    %c0_33 = arith.constant 0 : index
    %c0_34 = arith.constant 0 : index
    %71 = vector.load %arg5[%c0_33, %c0_34] : memref<40x128xf32, #tpu.memory_space<vmem>>, vector<40x128xf32>
    %72 = arith.mulf %69, %69 : vector<40x128xf32>
    %73 = arith.mulf %70, %70 : vector<40x128xf32>
    %74 = arith.addf %72, %73 : vector<40x128xf32>
    %75 = arith.addf %71, %74 : vector<40x128xf32>
    %c0_35 = arith.constant 0 : index
    %c0_36 = arith.constant 0 : index
    %76 = vector.load %arg5[%c0_35, %c0_36] : memref<40x128xf32, #tpu.memory_space<vmem>>, vector<40x128xf32>
    tpu.vector_store %arg5[%c0_35, %c0_36], %75 {strides = array<i32>} : memref<40x128xf32, #tpu.memory_space<vmem>>, vector<40x128xf32>,
    %77 = vector.extract_strided_slice %2 {offsets = [6, 0], sizes = [1, 128], strides = [1, 1]} : vector<7x128xbf16> to vector<1x128xbf16>
    %78 = vector.broadcast %77 : vector<1x128xbf16> to vector<40x128xbf16>
    %79 = arith.mulf %0, %78 : vector<40x128xbf16>
    %cst_37 = arith.constant dense<0.000000e+00> : vector<40x256xf32>
    %80 = tpu.matmul %79, %1, %cst_37 {dimension_numbers = #tpu.dot_dimension_numbers<[1], [0], [0], [1], [0, 0, 1, 1], [], []>} : vector<40x128xbf16>, vector<128x256xbf16>, vector<40x256xf32> -> vector<40x256xf32>
    %81 = vector.extract_strided_slice %80 {offsets = [0, 0], sizes = [40, 128], strides = [1, 1]} : vector<40x256xf32> to vector<40x128xf32>
    %82 = vector.extract_strided_slice %80 {offsets = [0, 128], sizes = [40, 128], strides = [1, 1]} : vector<40x256xf32> to vector<40x128xf32>
    %c0_38 = arith.constant 0 : index
    %c0_39 = arith.constant 0 : index
    %83 = vector.load %arg5[%c0_38, %c0_39] : memref<40x128xf32, #tpu.memory_space<vmem>>, vector<40x128xf32>
    %84 = arith.mulf %81, %81 : vector<40x128xf32>
    %85 = arith.mulf %82, %82 : vector<40x128xf32>
    %86 = arith.addf %84, %85 : vector<40x128xf32>
    %87 = arith.addf %83, %86 : vector<40x128xf32>
    %c0_40 = arith.constant 0 : index
    %c0_41 = arith.constant 0 : index
    %88 = vector.load %arg5[%c0_40, %c0_41] : memref<40x128xf32, #tpu.memory_space<vmem>>, vector<40x128xf32>
    tpu.vector_store %arg5[%c0_40, %c0_41], %87 {strides = array<i32>} : memref<40x128xf32, #tpu.memory_space<vmem>>, vector<40x128xf32>,
    %c0_42 = arith.constant 0 : index
    %c0_43 = arith.constant 0 : index
    %89 = vector.load %arg5[%c0_42, %c0_43] : memref<40x128xf32, #tpu.memory_space<vmem>>, vector<40x128xf32>
    %cst_44 = arith.constant 0.142857149 : f32
    %90 = vector.broadcast %cst_44 : f32 to vector<40x128xf32>
    %91 = arith.mulf %89, %90 : vector<40x128xf32>
    %c0_45 = arith.constant 0 : index
    %c0_46 = arith.constant 0 : index
    %92 = vector.load %arg4[%c0_45, %c0_46] : memref<40x128xf32, #tpu.memory_space<vmem>>, vector<40x128xf32>
    tpu.vector_store %arg4[%c0_45, %c0_46], %91 {strides = array<i32>} : memref<40x128xf32, #tpu.memory_space<vmem>>, vector<40x128xf32>,
    return
  }
  func.func @transform_0(%arg0: i32) -> (i32, i32) {
    %c0_i32 = arith.constant 0 : i32
    %c0_i32_0 = arith.constant 0 : i32
    return %arg0, %c0_i32 : i32, i32
  }
  func.func @transform_1(%arg0: i32) -> (i32, i32) {
    %c0_i32 = arith.constant 0 : i32
    %c0_i32_0 = arith.constant 0 : i32
    %c0_i32_1 = arith.constant 0 : i32
    return %c0_i32, %c0_i32_0 : i32, i32
  }
  func.func @transform_2(%arg0: i32) -> (i32, i32) {
    %c0_i32 = arith.constant 0 : i32
    %c0_i32_0 = arith.constant 0 : i32
    %c0_i32_1 = arith.constant 0 : i32
    return %c0_i32, %c0_i32_0 : i32, i32
  }
  func.func @transform_3(%arg0: i32) -> (i32, i32) {
    %c0_i32 = arith.constant 0 : i32
    %c0_i32_0 = arith.constant 0 : i32
    return %arg0, %c0_i32 : i32, i32
  }
}

</mosaic_0001>

<llo_original>
// kernel: tpu_custom_call.1
$region0: #{tpu_custom_call.1}
  #allocation0 [shape = 'u32[]', space=smem, size = 0x4, offset = 0x4, fixed_abs, tag = 'smem constant byte address 0x4 - core index']
  #allocation1 [shape = 'u32[144,128]{1,0:T(1,128)}', space=vmem, size = 0x12000, scoped, tag = 'internal scratch']
  #allocation2 [shape = 'f32[40,128]{1,0:T(8,128)}', space=vmem, size = 0x5000, scoped, tag = 'scratch operand']
  %s0 = inlined_call_operand.hbm [shape: bf16[40,128], index: 0, kind: input, shape index: {}]
  %s1 = inlined_call_operand.hbm [shape: bf16[7,128], index: 1, kind: input, shape index: {}]
  %s2 = inlined_call_operand.hbm [shape: bf16[128,256], index: 2, kind: input, shape index: {}]
  %s3 = inlined_call_operand.hbm [shape: f32[40,128], index: 3, kind: output, shape index: {}]
  %s4 = sld [smem:[#allocation0]]
  $region34: #{tpu_custom_call.1} parent=0
    _
  %s6 = ssub.s32 1, %s4
  %s7 = scalar_select 0, %s6, %s4
  $region1: #{tpu_custom_call.1} parent=0
    #allocation3 [shape = 'u8[10240]{0}', space=vmem, size = 0x2800, scoped, tag = 'input window, operand 0, single buffered']
    #allocation4 [shape = 's32[1]{0}', space=sflag, size = 0x4, scoped, tag = 'scoped memory for tpu_custom_call.1']
    #allocation5 [shape = 's32[1]{0}', space=sflag, size = 0x4, scoped, tag = 'scoped memory for tpu_custom_call.1']
    #allocation6 [shape = 'u8[2048]{0}', space=vmem, size = 0x800, scoped, tag = 'input window, operand 1, single buffered']
    #allocation7 [shape = 's32[1]{0}', space=sflag, size = 0x4, scoped, tag = 'scoped memory for tpu_custom_call.1']
    #allocation8 [shape = 'u8[65536]{0}', space=vmem, size = 0x10000, scoped, tag = 'input window, operand 2, single buffered']
    #allocation9 [shape = 'u8[20480]{0}', space=vmem, size = 0x5000, scoped, tag = 'output window, operand 0, single buffered']
    %8 = vsyncpa [#allocation4], 0
    %9 = vsyncpa [#allocation7], 0
    %10 = vsyncpa [#allocation5], 0
    // Predicated region
    $region2: #{tpu_custom_call.1} parent=1 // pred_check
      _
    $region3: #{tpu_custom_call.1} parent=1 // pred_check_branch
      %12 = sbr.rel (0) target = $region5
    $region4: #{tpu_custom_call.1} parent=1 // pred_region
      %s14 = ssub.s32 320, 320
      %15 = vsyncadd [#allocation4], %s14
      %s16 = sshll.u32 [#allocation3], 4
      %s17 = int_to_ptr.vmem [resolvable:$true] %s16
      %22 = dma.hbm_to_vmem [thread:$0]  %s0, 320, %s17, [#allocation4], 64, 64, 4
    $region5: #{tpu_custom_call.1} parent=1 // pred_fallthru
      _
    // Predicated region
    $region6: #{tpu_custom_call.1} parent=1 // pred_check
      _
    $region7: #{tpu_custom_call.1} parent=1 // pred_check_branch
      %24 = sbr.rel (0) target = $region9
    $region8: #{tpu_custom_call.1} parent=1 // pred_region
      %s26 = ssub.s32 64, 64
      %27 = vsyncadd [#allocation7], %s26
      %s29 = sshll.u32 [#allocation6], 4
      %s30 = int_to_ptr.vmem [resolvable:$true] %s29
      %32 = dma.hbm_to_vmem [thread:$0]  %s1, 64, %s30, [#allocation7]
    $region9: #{tpu_custom_call.1} parent=1 // pred_fallthru
      _
    // Predicated region
    $region10: #{tpu_custom_call.1} parent=1 // pred_check
      _
    $region11: #{tpu_custom_call.1} parent=1 // pred_check_branch
      %34 = sbr.rel (0) target = $region13
    $region12: #{tpu_custom_call.1} parent=1 // pred_region
      %s36 = ssub.s32 2048, 2048
      %37 = vsyncadd [#allocation7], %s36
      %s38 = sshll.u32 [#allocation8], 4
      %s39 = int_to_ptr.vmem [resolvable:$true] %s38
      %44 = dma.hbm_to_vmem [thread:$0]  %s2, 2048, %s39, [#allocation7], 128, 128, 8
    $region13: #{tpu_custom_call.1} parent=1 // pred_fallthru
      _
    // Predicated region
    $region14: #{tpu_custom_call.1} parent=1 // pred_check
      _
    $region15: #{tpu_custom_call.1} parent=1 // pred_check_branch
      %46 = sbr.rel (0) target = $region17
    $region16: #{tpu_custom_call.1} parent=1 // pred_region
      %47 = dma.done [#allocation4], 320
    $region17: #{tpu_custom_call.1} parent=1 // pred_fallthru
      _
    // Predicated region
    $region18: #{tpu_custom_call.1} parent=1 // pred_check
      _
    $region19: #{tpu_custom_call.1} parent=1 // pred_check_branch
      %49 = sbr.rel (0) target = $region21
    $region20: #{tpu_custom_call.1} parent=1 // pred_region
      %50 = dma.done [#allocation7], 64
    $region21: #{tpu_custom_call.1} parent=1 // pred_fallthru
      _
    // Predicated region
    $region22: #{tpu_custom_call.1} parent=1 // pred_check
      _
    $region23: #{tpu_custom_call.1} parent=1 // pred_check_branch
      %52 = sbr.rel (0) target = $region25
    $region24: #{tpu_custom_call.1} parent=1 // pred_region
      %53 = dma.done [#allocation7], 2048
    $region25: #{tpu_custom_call.1} parent=1 // pred_fallthru
      _
    %v55 = vld [vmem:[#allocation3] sm:$0xf]
    %v56 = vld [vmem:[#allocation3 + $0x4] sm:$0xf]
    %v57 = vld [vmem:[#allocation3 + $0x8] sm:$0xf]
    %v58 = vld [vmem:[#allocation3 + $0xc] sm:$0xf]
    %v59 = vld [vmem:[#allocation3 + $0x10] sm:$0xf]
    %v60 = vld [vmem:[#allocation8] sm:$0xff]
    %v61 = vld [vmem:[#allocation8 + $0x8] sm:$0xff]
    %v62 = vld [vmem:[#allocation8 + $0x10] sm:$0xff]
    %v63 = vld [vmem:[#allocation8 + $0x18] sm:$0xff]
    %v64 = vld [vmem:[#allocation8 + $0x20] sm:$0xff]
    %v65 = vld [vmem:[#allocation8 + $0x28] sm:$0xff]
    %v66 = vld [vmem:[#allocation8 + $0x30] sm:$0xff]
    %v67 = vld [vmem:[#allocation8 + $0x38] sm:$0xff]
    %v68 = vld [vmem:[#allocation8 + $0x40] sm:$0xff]
    %v69 = vld [vmem:[#allocation8 + $0x48] sm:$0xff]
    %v70 = vld [vmem:[#allocation8 + $0x50] sm:$0xff]
    %v71 = vld [vmem:[#allocation8 + $0x58] sm:$0xff]
    %v72 = vld [vmem:[#allocation8 + $0x60] sm:$0xff]
    %v73 = vld [vmem:[#allocation8 + $0x68] sm:$0xff]
    %v74 = vld [vmem:[#allocation8 + $0x70] sm:$0xff]
    %v75 = vld [vmem:[#allocation8 + $0x78] sm:$0xff]
    %v76 = vld [vmem:[#allocation6] sm:$0xf]
    %77 = vst [vmem:[#allocation2] sm:$0xff] 0.0
    %78 = vst [vmem:[#allocation2 + $0x8] sm:$0xff] 0.0
    %79 = vst [vmem:[#allocation2 + $0x10] sm:$0xff] 0.0
    %80 = vst [vmem:[#allocation2 + $0x18] sm:$0xff] 0.0
    %81 = vst [vmem:[#allocation2 + $0x20] sm:$0xff] 0.0
    %v83 = vpack.i.b16 %v76, %v76
    %v85 = vlaneseq
    %v86 = vshrl.u32 %v85, 7
    %v87 = vsub.s32 0, %v86
    %v88 = vrot.slane %v83, %v87
    %v90 = vunpack.c.l.b16 %v88
    %v91 = vpack.c.b16 %v90, %v90
    %v93 = vmul.bf16 %v55, %v91
    %v94 = vmul.bf16 %v56, %v91
    %v95 = vmul.bf16 %v57, %v91
    %v96 = vmul.bf16 %v58, %v91
    %v97 = vmul.bf16 %v59, %v91
    %v103 = vunpack.c.l.b16 %v93
    %v104 = vunpack.c.l.b16 %v94
    %v105 = vunpack.c.l.b16 %v95
    %v106 = vunpack.c.l.b16 %v96
    %v107 = vunpack.c.l.b16 %v97
    %v108 = vpack.c.b16 %v104, %v103
    %v109 = vpack.c.b16 %v106, %v105
    %v110 = vpack.c.b16 %v107, %v107
    %v130 = vunpack.c.l.b16 %v60
    %v131 = vunpack.c.h.b16 %v60
    %v132 = vunpack.c.l.b16 %v61
    %v133 = vunpack.c.h.b16 %v61
    %v134 = vunpack.c.l.b16 %v62
    %v135 = vunpack.c.h.b16 %v62
    %v136 = vunpack.c.l.b16 %v63
    %v137 = vunpack.c.h.b16 %v63
    %v138 = vunpack.c.l.b16 %v64
    %v139 = vunpack.c.h.b16 %v64
    %v140 = vunpack.c.l.b16 %v65
    %v141 = vunpack.c.h.b16 %v65
    %v142 = vunpack.c.l.b16 %v66
    %v143 = vunpack.c.h.b16 %v66
    %v144 = vunpack.c.l.b16 %v67
    %v145 = vunpack.c.h.b16 %v67
    %v146 = vunpack.c.l.b16 %v68
    %v147 = vunpack.c.h.b16 %v68
    %v148 = vunpack.c.l.b16 %v69
    %v149 = vunpack.c.h.b16 %v69
    %v150 = vunpack.c.l.b16 %v70
    %v151 = vunpack.c.h.b16 %v70
    %v152 = vunpack.c.l.b16 %v71
    %v153 = vunpack.c.h.b16 %v71
    %v154 = vunpack.c.l.b16 %v72
    %v155 = vunpack.c.h.b16 %v72
    %v156 = vunpack.c.l.b16 %v73
    %v157 = vunpack.c.h.b16 %v73
    %v158 = vunpack.c.l.b16 %v74
    %v159 = vunpack.c.h.b16 %v74
    %v160 = vunpack.c.l.b16 %v75
    %v161 = vunpack.c.h.b16 %v75
    %v162 = vpack.c.b16 %v132, %v130
    %v163 = vpack.c.b16 %v133, %v131
    %v164 = vpack.c.b16 %v136, %v134
    %v165 = vpack.c.b16 %v137, %v135
    %v166 = vpack.c.b16 %v140, %v138
    %v167 = vpack.c.b16 %v141, %v139
    %v168 = vpack.c.b16 %v144, %v142
    %v169 = vpack.c.b16 %v145, %v143
    %v170 = vpack.c.b16 %v148, %v146
    %v171 = vpack.c.b16 %v149, %v147
    %v172 = vpack.c.b16 %v152, %v150
    %v173 = vpack.c.b16 %v153, %v151
    %v174 = vpack.c.b16 %v156, %v154
    %v175 = vpack.c.b16 %v157, %v155
    %v176 = vpack.c.b16 %v160, %v158
    %v177 = vpack.c.b16 %v161, %v159
    %194 = vmatprep.subr.bf16.mxu0 %v177
    %195 = vmatpush1.bf16.msra.mxu0 %v176
    %196 = vmatprep.subr.bf16.mxu0 %v175
    %197 = vmatpush1.bf16.msra.mxu0 %v174
    %198 = vmatprep.subr.bf16.mxu0 %v173
    %199 = vmatpush1.bf16.msra.mxu0 %v172
    %200 = vmatprep.subr.bf16.mxu0 %v171
    %201 = vmatpush1.bf16.msra.mxu0 %v170
    %202 = vmatprep.subr.bf16.mxu0 %v169
    %203 = vmatpush1.bf16.msra.mxu0 %v168
    %204 = vmatprep.subr.bf16.mxu0 %v167
    %205 = vmatpush1.bf16.msra.mxu0 %v166
    %206 = vmatprep.subr.bf16.mxu0 %v165
    %207 = vmatpush1.bf16.msra.mxu0 %v164
    %208 = vmatprep.subr.bf16.mxu0 %v163
    %209 = vmatpush1.bf16.msra.mxu0 %v162
    %210 = vmatprep.subr.bf16.mxu0 0
    %211 = vmatpush2.bf16.msra.mxu0 0
    %212 = vmatprep.subr.bf16.mxu0 0
    %213 = vmatpush2.bf16.msra.mxu0 0
    %214 = vmatprep.subr.bf16.mxu0 0
    %215 = vmatpush2.bf16.msra.mxu0 0
    %216 = vmatprep.subr.bf16.mxu0 0
    %217 = vmatpush2.bf16.msra.mxu0 0
    %218 = vmatprep.subr.bf16.mxu0 0
    %219 = vmatpush2.bf16.msra.mxu0 0
    %220 = vmatprep.subr.bf16.mxu0 0
    %221 = vmatpush2.bf16.msra.mxu0 0
    %222 = vmatprep.subr.bf16.mxu0 0
    %223 = vmatpush2.bf16.msra.mxu0 0
    %224 = vmatprep.subr.bf16.mxu0 0
    %225 = vmatpush2.bf16.msra.mxu0 0
    %226 = vmatprep.mubr.bf16.mxu0 0
    %227 = vmatmul.mubr.bf16.gmra.mxu0 %v108
    %v228 = vpop.f32.mrf.mxu0
    %v229 = vadd.f32 0.0, %v228
    %v230 = vpop.f32.mrf.mxu0
    %v231 = vadd.f32 0.0, %v230
    %v232 = vpop.f32.mrf.mxu0
    %v233 = vadd.f32 0.0, %v232
    %v234 = vpop.f32.mrf.mxu0
    %v235 = vadd.f32 0.0, %v234
    %236 = vmatprep.mubr.bf16.mxu0 0
    %237 = vmatmul.mubr.bf16.gmra.mxu0 %v109
    %v238 = vpop.f32.mrf.mxu0
    %v239 = vadd.f32 0.0, %v238
    %v240 = vpop.f32.mrf.mxu0
    %v241 = vadd.f32 0.0, %v240
    %v242 = vpop.f32.mrf.mxu0
    %v243 = vadd.f32 0.0, %v242
    %v244 = vpop.f32.mrf.mxu0
    %v245 = vadd.f32 0.0, %v244
    %246 = vmatprep.mubr.bf16.mxu0 0
    %247 = vmatmul.mubr.bf16.gmra.mxu0 %v110
    %v248 = vpop.f32.mrf.mxu0
    %v249 = vadd.f32 0.0, %v248
    %v250 = vpop.f32.mrf.mxu0
    %v251 = vadd.f32 0.0, %v250
    %v252 = vpop.f32.mrf.mxu0
    %v253 = vpop.f32.mrf.mxu0
    %254 = vdwg.mxu0
    %v255 = vld [vmem:[#allocation2] sm:$0xff]
    %v256 = vld [vmem:[#allocation2 + $0x8] sm:$0xff]
    %v257 = vld [vmem:[#allocation2 + $0x10] sm:$0xff]
    %v258 = vld [vmem:[#allocation2 + $0x18] sm:$0xff]
    %v259 = vld [vmem:[#allocation2 + $0x20] sm:$0xff]
    %v260 = vmul.f32 %v229, %v229
    %v261 = vmul.f32 %v233, %v233
    %v262 = vmul.f32 %v239, %v239
    %v263 = vmul.f32 %v243, %v243
    %v264 = vmul.f32 %v249, %v249
    %v265 = vmul.f32 %v231, %v231
    %v266 = vmul.f32 %v235, %v235
    %v267 = vmul.f32 %v241, %v241
    %v268 = vmul.f32 %v245, %v245
    %v269 = vmul.f32 %v251, %v251
    %v270 = vadd.f32 %v260, %v265
    %v271 = vadd.f32 %v261, %v266
    %v272 = vadd.f32 %v262, %v267
    %v273 = vadd.f32 %v263, %v268
    %v274 = vadd.f32 %v264, %v269
    %v275 = vadd.f32 %v255, %v270
    %v276 = vadd.f32 %v256, %v271
    %v277 = vadd.f32 %v257, %v272
    %v278 = vadd.f32 %v258, %v273
    %v279 = vadd.f32 %v259, %v274
    %280 = vst [vmem:[#allocation2] sm:$0xff] %v275
    %281 = vst [vmem:[#allocation2 + $0x8] sm:$0xff] %v276
    %282 = vst [vmem:[#allocation2 + $0x10] sm:$0xff] %v277
    %283 = vst [vmem:[#allocation2 + $0x18] sm:$0xff] %v278
    %284 = vst [vmem:[#allocation2 + $0x20] sm:$0xff] %v279
    %v285 = vshrl.u32 %v76, 16
    %v286 = vpack.i.b16 %v285, %v285
    %v288 = vlaneseq
    %v289 = vshrl.u32 %v288, 7
    %v290 = vsub.s32 0, %v289
    %v291 = vrot.slane %v286, %v290
    %v293 = vunpack.c.l.b16 %v291
    %v294 = vpack.c.b16 %v293, %v293
    %v296 = vmul.bf16 %v55, %v294
    %v297 = vmul.bf16 %v56, %v294
    %v298 = vmul.bf16 %v57, %v294
    %v299 = vmul.bf16 %v58, %v294
    %v300 = vmul.bf16 %v59, %v294
    %v306 = vunpack.c.l.b16 %v296
    %v307 = vunpack.c.l.b16 %v297
    %v308 = vunpack.c.l.b16 %v298
    %v309 = vunpack.c.l.b16 %v299
    %v310 = vunpack.c.l.b16 %v300
    %v311 = vpack.c.b16 %v307, %v306
    %v312 = vpack.c.b16 %v309, %v308
    %v313 = vpack.c.b16 %v310, %v310
    %317 = vmatprep.subr.bf16.mxu0 %v177
    %318 = vmatpush1.bf16.msra.mxu0 %v176
    %319 = vmatprep.subr.bf16.mxu0 %v175
    %320 = vmatpush1.bf16.msra.mxu0 %v174
    %321 = vmatprep.subr.bf16.mxu0 %v173
    %322 = vmatpush1.bf16.msra.mxu0 %v172
    %323 = vmatprep.subr.bf16.mxu0 %v171
    %324 = vmatpush1.bf16.msra.mxu0 %v170
    %325 = vmatprep.subr.bf16.mxu0 %v169
    %326 = vmatpush1.bf16.msra.mxu0 %v168
    %327 = vmatprep.subr.bf16.mxu0 %v167
    %328 = vmatpush1.bf16.msra.mxu0 %v166
    %329 = vmatprep.subr.bf16.mxu0 %v165
    %330 = vmatpush1.bf16.msra.mxu0 %v164
    %331 = vmatprep.subr.bf16.mxu0 %v163
    %332 = vmatpush1.bf16.msra.mxu0 %v162
    %333 = vmatprep.subr.bf16.mxu0 0
    %334 = vmatpush2.bf16.msra.mxu0 0
    %335 = vmatprep.subr.bf16.mxu0 0
    %336 = vmatpush2.bf16.msra.mxu0 0
    %337 = vmatprep.subr.bf16.mxu0 0
    %338 = vmatpush2.bf16.msra.mxu0 0
    %339 = vmatprep.subr.bf16.mxu0 0
    %340 = vmatpush2.bf16.msra.mxu0 0
    %341 = vmatprep.subr.bf16.mxu0 0
    %342 = vmatpush2.bf16.msra.mxu0 0
    %343 = vmatprep.subr.bf16.mxu0 0
    %344 = vmatpush2.bf16.msra.mxu0 0
    %345 = vmatprep.subr.bf16.mxu0 0
    %346 = vmatpush2.bf16.msra.mxu0 0
    %347 = vmatprep.subr.bf16.mxu0 0
    %348 = vmatpush2.bf16.msra.mxu0 0
    %349 = vmatprep.mubr.bf16.mxu0 0
    %350 = vmatmul.mubr.bf16.gmra.mxu0 %v311
    %v351 = vpop.f32.mrf.mxu0
    %v352 = vadd.f32 0.0, %v351
    %v353 = vpop.f32.mrf.mxu0
    %v354 = vadd.f32 0.0, %v353
    %v355 = vpop.f32.mrf.mxu0
    %v356 = vadd.f32 0.0, %v355
    %v357 = vpop.f32.mrf.mxu0
    %v358 = vadd.f32 0.0, %v357
    %359 = vmatprep.mubr.bf16.mxu0 0
    %360 = vmatmul.mubr.bf16.gmra.mxu0 %v312
    %v361 = vpop.f32.mrf.mxu0
    %v362 = vadd.f32 0.0, %v361
    %v363 = vpop.f32.mrf.mxu0
    %v364 = vadd.f32 0.0, %v363
    %v365 = vpop.f32.mrf.mxu0
    %v366 = vadd.f32 0.0, %v365
    %v367 = vpop.f32.mrf.mxu0
    %v368 = vadd.f32 0.0, %v367
    %369 = vmatprep.mubr.bf16.mxu0 0
    %370 = vmatmul.mubr.bf16.gmra.mxu0 %v313
    %v371 = vpop.f32.mrf.mxu0
    %v372 = vadd.f32 0.0, %v371
    %v373 = vpop.f32.mrf.mxu0
    %v374 = vadd.f32 0.0, %v373
    %v375 = vpop.f32.mrf.mxu0
    %v376 = vpop.f32.mrf.mxu0
    %377 = vdwg.mxu0
    %v378 = vld [vmem:[#allocation2] sm:$0xff]
    %v379 = vld [vmem:[#allocation2 + $0x8] sm:$0xff]
    %v380 = vld [vmem:[#allocation2 + $0x10] sm:$0xff]
    %v381 = vld [vmem:[#allocation2 + $0x18] sm:$0xff]
    %v382 = vld [vmem:[#allocation2 + $0x20] sm:$0xff]
    %v383 = vmul.f32 %v352, %v352
    %v384 = vmul.f32 %v356, %v356
    %v385 = vmul.f32 %v362, %v362
    %v386 = vmul.f32 %v366, %v366
    %v387 = vmul.f32 %v372, %v372
    %v388 = vmul.f32 %v354, %v354
    %v389 = vmul.f32 %v358, %v358
    %v390 = vmul.f32 %v364, %v364
    %v391 = vmul.f32 %v368, %v368
    %v392 = vmul.f32 %v374, %v374
    %v393 = vadd.f32 %v383, %v388
    %v394 = vadd.f32 %v384, %v389
    %v395 = vadd.f32 %v385, %v390
    %v396 = vadd.f32 %v386, %v391
    %v397 = vadd.f32 %v387, %v392
    %v398 = vadd.f32 %v378, %v393
    %v399 = vadd.f32 %v379, %v394
    %v400 = vadd.f32 %v380, %v395
    %v401 = vadd.f32 %v381, %v396
    %v402 = vadd.f32 %v382, %v397
    %403 = vst [vmem:[#allocation2] sm:$0xff] %v398
    %404 = vst [vmem:[#allocation2 + $0x8] sm:$0xff] %v399
    %405 = vst [vmem:[#allocation2 + $0x10] sm:$0xff] %v400
    %406 = vst [vmem:[#allocation2 + $0x18] sm:$0xff] %v401
    %407 = vst [vmem:[#allocation2 + $0x20] sm:$0xff] %v402
    %v408 = vlaneseq
    %v409 = vshrl.u32 %v408, 7
    %v410 = vsub.s32 1, %v409
    %v411 = vrot.slane %v83, %v410
    %v413 = vunpack.c.l.b16 %v411
    %v414 = vpack.c.b16 %v413, %v413
    %v416 = vmul.bf16 %v55, %v414
    %v417 = vmul.bf16 %v56, %v414
    %v418 = vmul.bf16 %v57, %v414
    %v419 = vmul.bf16 %v58, %v414
    %v420 = vmul.bf16 %v59, %v414
    %v426 = vunpack.c.l.b16 %v416
    %v427 = vunpack.c.l.b16 %v417
    %v428 = vunpack.c.l.b16 %v418
    %v429 = vunpack.c.l.b16 %v419
    %v430 = vunpack.c.l.b16 %v420
    %v431 = vpack.c.b16 %v427, %v426
    %v432 = vpack.c.b16 %v429, %v428
    %v433 = vpack.c.b16 %v430, %v430
    %437 = vmatprep.subr.bf16.mxu0 %v177
    %438 = vmatpush1.bf16.msra.mxu0 %v176
    %439 = vmatprep.subr.bf16.mxu0 %v175
    %440 = vmatpush1.bf16.msra.mxu0 %v174
    %441 = vmatprep.subr.bf16.mxu0 %v173
    %442 = vmatpush1.bf16.msra.mxu0 %v172
    %443 = vmatprep.subr.bf16.mxu0 %v171
    %444 = vmatpush1.bf16.msra.mxu0 %v170
    %445 = vmatprep.subr.bf16.mxu0 %v169
    %446 = vmatpush1.bf16.msra.mxu0 %v168
    %447 = vmatprep.subr.bf16.mxu0 %v167
    %448 = vmatpush1.bf16.msra.mxu0 %v166
    %449 = vmatprep.subr.bf16.mxu0 %v165
    %450 = vmatpush1.bf16.msra.mxu0 %v164
    %451 = vmatprep.subr.bf16.mxu0 %v163
    %452 = vmatpush1.bf16.msra.mxu0 %v162
    %453 = vmatprep.subr.bf16.mxu0 0
    %454 = vmatpush2.bf16.msra.mxu0 0
    %455 = vmatprep.subr.bf16.mxu0 0
    %456 = vmatpush2.bf16.msra.mxu0 0
    %457 = vmatprep.subr.bf16.mxu0 0
    %458 = vmatpush2.bf16.msra.mxu0 0
    %459 = vmatprep.subr.bf16.mxu0 0
    %460 = vmatpush2.bf16.msra.mxu0 0
    %461 = vmatprep.subr.bf16.mxu0 0
    %462 = vmatpush2.bf16.msra.mxu0 0
    %463 = vmatprep.subr.bf16.mxu0 0
    %464 = vmatpush2.bf16.msra.mxu0 0
    %465 = vmatprep.subr.bf16.mxu0 0
    %466 = vmatpush2.bf16.msra.mxu0 0
    %467 = vmatprep.subr.bf16.mxu0 0
    %468 = vmatpush2.bf16.msra.mxu0 0
    %469 = vmatprep.mubr.bf16.mxu0 0
    %470 = vmatmul.mubr.bf16.gmra.mxu0 %v431
    %v471 = vpop.f32.mrf.mxu0
    %v472 = vadd.f32 0.0, %v471
    %v473 = vpop.f32.mrf.mxu0
    %v474 = vadd.f32 0.0, %v473
    %v475 = vpop.f32.mrf.mxu0
    %v476 = vadd.f32 0.0, %v475
    %v477 = vpop.f32.mrf.mxu0
    %v478 = vadd.f32 0.0, %v477
    %479 = vmatprep.mubr.bf16.mxu0 0
    %480 = vmatmul.mubr.bf16.gmra.mxu0 %v432
    %v481 = vpop.f32.mrf.mxu0
    %v482 = vadd.f32 0.0, %v481
    %v483 = vpop.f32.mrf.mxu0
    %v484 = vadd.f32 0.0, %v483
    %v485 = vpop.f32.mrf.mxu0
    %v486 = vadd.f32 0.0, %v485
    %v487 = vpop.f32.mrf.mxu0
    %v488 = vadd.f32 0.0, %v487
    %489 = vmatprep.mubr.bf16.mxu0 0
    %490 = vmatmul.mubr.bf16.gmra.mxu0 %v433
    %v491 = vpop.f32.mrf.mxu0
    %v492 = vadd.f32 0.0, %v491
    %v493 = vpop.f32.mrf.mxu0
    %v494 = vadd.f32 0.0, %v493
    %v495 = vpop.f32.mrf.mxu0
    %v496 = vpop.f32.mrf.mxu0
    %497 = vdwg.mxu0
    %v498 = vld [vmem:[#allocation2] sm:$0xff]
    %v499 = vld [vmem:[#allocation2 + $0x8] sm:$0xff]
    %v500 = vld [vmem:[#allocation2 + $0x10] sm:$0xff]
    %v501 = vld [vmem:[#allocation2 + $0x18] sm:$0xff]
    %v502 = vld [vmem:[#allocation2 + $0x20] sm:$0xff]
    %v503 = vmul.f32 %v472, %v472
    %v504 = vmul.f32 %v476, %v476
    %v505 = vmul.f32 %v482, %v482
    %v506 = vmul.f32 %v486, %v486
    %v507 = vmul.f32 %v492, %v492
    %v508 = vmul.f32 %v474, %v474
    %v509 = vmul.f32 %v478, %v478
    %v510 = vmul.f32 %v484, %v484
    %v511 = vmul.f32 %v488, %v488
    %v512 = vmul.f32 %v494, %v494
    %v513 = vadd.f32 %v503, %v508
    %v514 = vadd.f32 %v504, %v509
    %v515 = vadd.f32 %v505, %v510
    %v516 = vadd.f32 %v506, %v511
    %v517 = vadd.f32 %v507, %v512
    %v518 = vadd.f32 %v498, %v513
    %v519 = vadd.f32 %v499, %v514
    %v520 = vadd.f32 %v500, %v515
    %v521 = vadd.f32 %v501, %v516
    %v522 = vadd.f32 %v502, %v517
    %523 = vst [vmem:[#allocation2] sm:$0xff] %v518
    %524 = vst [vmem:[#allocation2 + $0x8] sm:$0xff] %v519
    %525 = vst [vmem:[#allocation2 + $0x10] sm:$0xff] %v520
    %526 = vst [vmem:[#allocation2 + $0x18] sm:$0xff] %v521
    %527 = vst [vmem:[#allocation2 + $0x20] sm:$0xff] %v522
    %v528 = vlaneseq
    %v529 = vshrl.u32 %v528, 7
    %v530 = vsub.s32 1, %v529
    %v531 = vrot.slane %v286, %v530
    %v533 = vunpack.c.l.b16 %v531
    %v534 = vpack.c.b16 %v533, %v533
    %v536 = vmul.bf16 %v55, %v534
    %v537 = vmul.bf16 %v56, %v534
    %v538 = vmul.bf16 %v57, %v534
    %v539 = vmul.bf16 %v58, %v534
    %v540 = vmul.bf16 %v59, %v534
    %v546 = vunpack.c.l.b16 %v536
    %v547 = vunpack.c.l.b16 %v537
    %v548 = vunpack.c.l.b16 %v538
    %v549 = vunpack.c.l.b16 %v539
    %v550 = vunpack.c.l.b16 %v540
    %v551 = vpack.c.b16 %v547, %v546
    %v552 = vpack.c.b16 %v549, %v548
    %v553 = vpack.c.b16 %v550, %v550
    %557 = vmatprep.subr.bf16.mxu0 %v177
    %558 = vmatpush1.bf16.msra.mxu0 %v176
    %559 = vmatprep.subr.bf16.mxu0 %v175
    %560 = vmatpush1.bf16.msra.mxu0 %v174
    %561 = vmatprep.subr.bf16.mxu0 %v173
    %562 = vmatpush1.bf16.msra.mxu0 %v172
    %563 = vmatprep.subr.bf16.mxu0 %v171
    %564 = vmatpush1.bf16.msra.mxu0 %v170
    %565 = vmatprep.subr.bf16.mxu0 %v169
    %566 = vmatpush1.bf16.msra.mxu0 %v168
    %567 = vmatprep.subr.bf16.mxu0 %v167
    %568 = vmatpush1.bf16.msra.mxu0 %v166
    %569 = vmatprep.subr.bf16.mxu0 %v165
    %570 = vmatpush1.bf16.msra.mxu0 %v164
    %571 = vmatprep.subr.bf16.mxu0 %v163
    %572 = vmatpush1.bf16.msra.mxu0 %v162
    %573 = vmatprep.subr.bf16.mxu0 0
    %574 = vmatpush2.bf16.msra.mxu0 0
    %575 = vmatprep.subr.bf16.mxu0 0
    %576 = vmatpush2.bf16.msra.mxu0 0
    %577 = vmatprep.subr.bf16.mxu0 0
    %578 = vmatpush2.bf16.msra.mxu0 0
    %579 = vmatprep.subr.bf16.mxu0 0
    %580 = vmatpush2.bf16.msra.mxu0 0
    %581 = vmatprep.subr.bf16.mxu0 0
    %582 = vmatpush2.bf16.msra.mxu0 0
    %583 = vmatprep.subr.bf16.mxu0 0
    %584 = vmatpush2.bf16.msra.mxu0 0
    %585 = vmatprep.subr.bf16.mxu0 0
    %586 = vmatpush2.bf16.msra.mxu0 0
    %587 = vmatprep.subr.bf16.mxu0 0
    %588 = vmatpush2.bf16.msra.mxu0 0
    %589 = vmatprep.mubr.bf16.mxu0 0
    %590 = vmatmul.mubr.bf16.gmra.mxu0 %v551
    %v591 = vpop.f32.mrf.mxu0
    %v592 = vadd.f32 0.0, %v591
    %v593 = vpop.f32.mrf.mxu0
    %v594 = vadd.f32 0.0, %v593
    %v595 = vpop.f32.mrf.mxu0
    %v596 = vadd.f32 0.0, %v595
    %v597 = vpop.f32.mrf.mxu0
    %v598 = vadd.f32 0.0, %v597
    %599 = vmatprep.mubr.bf16.mxu0 0
    %600 = vmatmul.mubr.bf16.gmra.mxu0 %v552
    %v601 = vpop.f32.mrf.mxu0
    %v602 = vadd.f32 0.0, %v601
    %v603 = vpop.f32.mrf.mxu0
    %v604 = vadd.f32 0.0, %v603
    %v605 = vpop.f32.mrf.mxu0
    %v606 = vadd.f32 0.0, %v605
    %v607 = vpop.f32.mrf.mxu0
    %v608 = vadd.f32 0.0, %v607
    %609 = vmatprep.mubr.bf16.mxu0 0
    %610 = vmatmul.mubr.bf16.gmra.mxu0 %v553
    %v611 = vpop.f32.mrf.mxu0
    %v612 = vadd.f32 0.0, %v611
    %v613 = vpop.f32.mrf.mxu0
    %v614 = vadd.f32 0.0, %v613
    %v615 = vpop.f32.mrf.mxu0
    %v616 = vpop.f32.mrf.mxu0
    %617 = vdwg.mxu0
    %v618 = vld [vmem:[#allocation2] sm:$0xff]
    %v619 = vld [vmem:[#allocation2 + $0x8] sm:$0xff]
    %v620 = vld [vmem:[#allocation2 + $0x10] sm:$0xff]
    %v621 = vld [vmem:[#allocation2 + $0x18] sm:$0xff]
    %v622 = vld [vmem:[#allocation2 + $0x20] sm:$0xff]
    %v623 = vmul.f32 %v592, %v592
    %v624 = vmul.f32 %v596, %v596
    %v625 = vmul.f32 %v602, %v602
    %v626 = vmul.f32 %v606, %v606
    %v627 = vmul.f32 %v612, %v612
    %v628 = vmul.f32 %v594, %v594
    %v629 = vmul.f32 %v598, %v598
    %v630 = vmul.f32 %v604, %v604
    %v631 = vmul.f32 %v608, %v608
    %v632 = vmul.f32 %v614, %v614
    %v633 = vadd.f32 %v623, %v628
    %v634 = vadd.f32 %v624, %v629
    %v635 = vadd.f32 %v625, %v630
    %v636 = vadd.f32 %v626, %v631
    %v637 = vadd.f32 %v627, %v632
    %v638 = vadd.f32 %v618, %v633
    %v639 = vadd.f32 %v619, %v634
    %v640 = vadd.f32 %v620, %v635
    %v641 = vadd.f32 %v621, %v636
    %v642 = vadd.f32 %v622, %v637
    %643 = vst [vmem:[#allocation2] sm:$0xff] %v638
    %644 = vst [vmem:[#allocation2 + $0x8] sm:$0xff] %v639
    %645 = vst [vmem:[#allocation2 + $0x10] sm:$0xff] %v640
    %646 = vst [vmem:[#allocation2 + $0x18] sm:$0xff] %v641
    %647 = vst [vmem:[#allocation2 + $0x20] sm:$0xff] %v642
    %v648 = vlaneseq
    %v649 = vshrl.u32 %v648, 7
    %v650 = vsub.s32 2, %v649
    %v651 = vrot.slane %v83, %v650
    %v653 = vunpack.c.l.b16 %v651
    %v654 = vpack.c.b16 %v653, %v653
    %v656 = vmul.bf16 %v55, %v654
    %v657 = vmul.bf16 %v56, %v654
    %v658 = vmul.bf16 %v57, %v654
    %v659 = vmul.bf16 %v58, %v654
    %v660 = vmul.bf16 %v59, %v654
    %v666 = vunpack.c.l.b16 %v656
    %v667 = vunpack.c.l.b16 %v657
    %v668 = vunpack.c.l.b16 %v658
    %v669 = vunpack.c.l.b16 %v659
    %v670 = vunpack.c.l.b16 %v660
    %v671 = vpack.c.b16 %v667, %v666
    %v672 = vpack.c.b16 %v669, %v668
    %v673 = vpack.c.b16 %v670, %v670
    %677 = vmatprep.subr.bf16.mxu0 %v177
    %678 = vmatpush1.bf16.msra.mxu0 %v176
    %679 = vmatprep.subr.bf16.mxu0 %v175
    %680 = vmatpush1.bf16.msra.mxu0 %v174
    %681 = vmatprep.subr.bf16.mxu0 %v173
    %682 = vmatpush1.bf16.msra.mxu0 %v172
    %683 = vmatprep.subr.bf16.mxu0 %v171
    %684 = vmatpush1.bf16.msra.mxu0 %v170
    %685 = vmatprep.subr.bf16.mxu0 %v169
    %686 = vmatpush1.bf16.msra.mxu0 %v168
    %687 = vmatprep.subr.bf16.mxu0 %v167
    %688 = vmatpush1.bf16.msra.mxu0 %v166
    %689 = vmatprep.subr.bf16.mxu0 %v165
    %690 = vmatpush1.bf16.msra.mxu0 %v164
    %691 = vmatprep.subr.bf16.mxu0 %v163
    %692 = vmatpush1.bf16.msra.mxu0 %v162
    %693 = vmatprep.subr.bf16.mxu0 0
    %694 = vmatpush2.bf16.msra.mxu0 0
    %695 = vmatprep.subr.bf16.mxu0 0
    %696 = vmatpush2.bf16.msra.mxu0 0
    %697 = vmatprep.subr.bf16.mxu0 0
    %698 = vmatpush2.bf16.msra.mxu0 0
    %699 = vmatprep.subr.bf16.mxu0 0
    %700 = vmatpush2.bf16.msra.mxu0 0
    %701 = vmatprep.subr.bf16.mxu0 0
    %702 = vmatpush2.bf16.msra.mxu0 0
    %703 = vmatprep.subr.bf16.mxu0 0
    %704 = vmatpush2.bf16.msra.mxu0 0
    %705 = vmatprep.subr.bf16.mxu0 0
    %706 = vmatpush2.bf16.msra.mxu0 0
    %707 = vmatprep.subr.bf16.mxu0 0
    %708 = vmatpush2.bf16.msra.mxu0 0
    %709 = vmatprep.mubr.bf16.mxu0 0
    %710 = vmatmul.mubr.bf16.gmra.mxu0 %v671
    %v711 = vpop.f32.mrf.mxu0
    %v712 = vadd.f32 0.0, %v711
    %v713 = vpop.f32.mrf.mxu0
    %v714 = vadd.f32 0.0, %v713
    %v715 = vpop.f32.mrf.mxu0
    %v716 = vadd.f32 0.0, %v715
    %v717 = vpop.f32.mrf.mxu0
    %v718 = vadd.f32 0.0, %v717
    %719 = vmatprep.mubr.bf16.mxu0 0
    %720 = vmatmul.mubr.bf16.gmra.mxu0 %v672
    %v721 = vpop.f32.mrf.mxu0
    %v722 = vadd.f32 0.0, %v721
    %v723 = vpop.f32.mrf.mxu0
    %v724 = vadd.f32 0.0, %v723
    %v725 = vpop.f32.mrf.mxu0
    %v726 = vadd.f32 0.0, %v725
    %v727 = vpop.f32.mrf.mxu0
    %v728 = vadd.f32 0.0, %v727
    %729 = vmatprep.mubr.bf16.mxu0 0
    %730 = vmatmul.mubr.bf16.gmra.mxu0 %v673
    %v731 = vpop.f32.mrf.mxu0
    %v732 = vadd.f32 0.0, %v731
    %v733 = vpop.f32.mrf.mxu0
    %v734 = vadd.f32 0.0, %v733
    %v735 = vpop.f32.mrf.mxu0
    %v736 = vpop.f32.mrf.mxu0
    %737 = vdwg.mxu0
    %v738 = vld [vmem:[#allocation2] sm:$0xff]
    %v739 = vld [vmem:[#allocation2 + $0x8] sm:$0xff]
    %v740 = vld [vmem:[#allocation2 + $0x10] sm:$0xff]
    %v741 = vld [vmem:[#allocation2 + $0x18] sm:$0xff]
    %v742 = vld [vmem:[#allocation2 + $0x20] sm:$0xff]
    %v743 = vmul.f32 %v712, %v712
    %v744 = vmul.f32 %v716, %v716
    %v745 = vmul.f32 %v722, %v722
    %v746 = vmul.f32 %v726, %v726
    %v747 = vmul.f32 %v732, %v732
    %v748 = vmul.f32 %v714, %v714
    %v749 = vmul.f32 %v718, %v718
    %v750 = vmul.f32 %v724, %v724
    %v751 = vmul.f32 %v728, %v728
    %v752 = vmul.f32 %v734, %v734
    %v753 = vadd.f32 %v743, %v748
    %v754 = vadd.f32 %v744, %v749
    %v755 = vadd.f32 %v745, %v750
    %v756 = vadd.f32 %v746, %v751
    %v757 = vadd.f32 %v747, %v752
    %v758 = vadd.f32 %v738, %v753
    %v759 = vadd.f32 %v739, %v754
    %v760 = vadd.f32 %v740, %v755
    %v761 = vadd.f32 %v741, %v756
    %v762 = vadd.f32 %v742, %v757
    %763 = vst [vmem:[#allocation2] sm:$0xff] %v758
    %764 = vst [vmem:[#allocation2 + $0x8] sm:$0xff] %v759
    %765 = vst [vmem:[#allocation2 + $0x10] sm:$0xff] %v760
    %766 = vst [vmem:[#allocation2 + $0x18] sm:$0xff] %v761
    %767 = vst [vmem:[#allocation2 + $0x20] sm:$0xff] %v762
    %v768 = vlaneseq
    %v769 = vshrl.u32 %v768, 7
    %v770 = vsub.s32 2, %v769
    %v771 = vrot.slane %v286, %v770
    %v773 = vunpack.c.l.b16 %v771
    %v774 = vpack.c.b16 %v773, %v773
    %v776 = vmul.bf16 %v55, %v774
    %v777 = vmul.bf16 %v56, %v774
    %v778 = vmul.bf16 %v57, %v774
    %v779 = vmul.bf16 %v58, %v774
    %v780 = vmul.bf16 %v59, %v774
    %v786 = vunpack.c.l.b16 %v776
    %v787 = vunpack.c.l.b16 %v777
    %v788 = vunpack.c.l.b16 %v778
    %v789 = vunpack.c.l.b16 %v779
    %v790 = vunpack.c.l.b16 %v780
    %v791 = vpack.c.b16 %v787, %v786
    %v792 = vpack.c.b16 %v789, %v788
    %v793 = vpack.c.b16 %v790, %v790
    %797 = vmatprep.subr.bf16.mxu0 %v177
    %798 = vmatpush1.bf16.msra.mxu0 %v176
    %799 = vmatprep.subr.bf16.mxu0 %v175
    %800 = vmatpush1.bf16.msra.mxu0 %v174
    %801 = vmatprep.subr.bf16.mxu0 %v173
    %802 = vmatpush1.bf16.msra.mxu0 %v172
    %803 = vmatprep.subr.bf16.mxu0 %v171
    %804 = vmatpush1.bf16.msra.mxu0 %v170
    %805 = vmatprep.subr.bf16.mxu0 %v169
    %806 = vmatpush1.bf16.msra.mxu0 %v168
    %807 = vmatprep.subr.bf16.mxu0 %v167
    %808 = vmatpush1.bf16.msra.mxu0 %v166
    %809 = vmatprep.subr.bf16.mxu0 %v165
    %810 = vmatpush1.bf16.msra.mxu0 %v164
    %811 = vmatprep.subr.bf16.mxu0 %v163
    %812 = vmatpush1.bf16.msra.mxu0 %v162
    %813 = vmatprep.subr.bf16.mxu0 0
    %814 = vmatpush2.bf16.msra.mxu0 0
    %815 = vmatprep.subr.bf16.mxu0 0
    %816 = vmatpush2.bf16.msra.mxu0 0
    %817 = vmatprep.subr.bf16.mxu0 0
    %818 = vmatpush2.bf16.msra.mxu0 0
    %819 = vmatprep.subr.bf16.mxu0 0
    %820 = vmatpush2.bf16.msra.mxu0 0
    %821 = vmatprep.subr.bf16.mxu0 0
    %822 = vmatpush2.bf16.msra.mxu0 0
    %823 = vmatprep.subr.bf16.mxu0 0
    %824 = vmatpush2.bf16.msra.mxu0 0
    %825 = vmatprep.subr.bf16.mxu0 0
    %826 = vmatpush2.bf16.msra.mxu0 0
    %827 = vmatprep.subr.bf16.mxu0 0
    %828 = vmatpush2.bf16.msra.mxu0 0
    %829 = vmatprep.mubr.bf16.mxu0 0
    %830 = vmatmul.mubr.bf16.gmra.mxu0 %v791
    %v831 = vpop.f32.mrf.mxu0
    %v832 = vadd.f32 0.0, %v831
    %v833 = vpop.f32.mrf.mxu0
    %v834 = vadd.f32 0.0, %v833
    %v835 = vpop.f32.mrf.mxu0
    %v836 = vadd.f32 0.0, %v835
    %v837 = vpop.f32.mrf.mxu0
    %v838 = vadd.f32 0.0, %v837
    %839 = vmatprep.mubr.bf16.mxu0 0
    %840 = vmatmul.mubr.bf16.gmra.mxu0 %v792
    %v841 = vpop.f32.mrf.mxu0
    %v842 = vadd.f32 0.0, %v841
    %v843 = vpop.f32.mrf.mxu0
    %v844 = vadd.f32 0.0, %v843
    %v845 = vpop.f32.mrf.mxu0
    %v846 = vadd.f32 0.0, %v845
    %v847 = vpop.f32.mrf.mxu0
    %v848 = vadd.f32 0.0, %v847
    %849 = vmatprep.mubr.bf16.mxu0 0
    %850 = vmatmul.mubr.bf16.gmra.mxu0 %v793
    %v851 = vpop.f32.mrf.mxu0
    %v852 = vadd.f32 0.0, %v851
    %v853 = vpop.f32.mrf.mxu0
    %v854 = vadd.f32 0.0, %v853
    %v855 = vpop.f32.mrf.mxu0
    %v856 = vpop.f32.mrf.mxu0
    %857 = vdwg.mxu0
    %v858 = vld [vmem:[#allocation2] sm:$0xff]
    %v859 = vld [vmem:[#allocation2 + $0x8] sm:$0xff]
    %v860 = vld [vmem:[#allocation2 + $0x10] sm:$0xff]
    %v861 = vld [vmem:[#allocation2 + $0x18] sm:$0xff]
    %v862 = vld [vmem:[#allocation2 + $0x20] sm:$0xff]
    %v863 = vmul.f32 %v832, %v832
    %v864 = vmul.f32 %v836, %v836
    %v865 = vmul.f32 %v842, %v842
    %v866 = vmul.f32 %v846, %v846
    %v867 = vmul.f32 %v852, %v852
    %v868 = vmul.f32 %v834, %v834
    %v869 = vmul.f32 %v838, %v838
    %v870 = vmul.f32 %v844, %v844
    %v871 = vmul.f32 %v848, %v848
    %v872 = vmul.f32 %v854, %v854
    %v873 = vadd.f32 %v863, %v868
    %v874 = vadd.f32 %v864, %v869
    %v875 = vadd.f32 %v865, %v870
    %v876 = vadd.f32 %v866, %v871
    %v877 = vadd.f32 %v867, %v872
    %v878 = vadd.f32 %v858, %v873
    %v879 = vadd.f32 %v859, %v874
    %v880 = vadd.f32 %v860, %v875
    %v881 = vadd.f32 %v861, %v876
    %v882 = vadd.f32 %v862, %v877
    %883 = vst [vmem:[#allocation2] sm:$0xff] %v878
    %884 = vst [vmem:[#allocation2 + $0x8] sm:$0xff] %v879
    %885 = vst [vmem:[#allocation2 + $0x10] sm:$0xff] %v880
    %886 = vst [vmem:[#allocation2 + $0x18] sm:$0xff] %v881
    %887 = vst [vmem:[#allocation2 + $0x20] sm:$0xff] %v882
    %v888 = vlaneseq
    %v889 = vshrl.u32 %v888, 7
    %v890 = vsub.s32 3, %v889
    %v891 = vrot.slane %v83, %v890
    %v893 = vunpack.c.l.b16 %v891
    %v894 = vpack.c.b16 %v893, %v893
    %v896 = vmul.bf16 %v55, %v894
    %v897 = vmul.bf16 %v56, %v894
    %v898 = vmul.bf16 %v57, %v894
    %v899 = vmul.bf16 %v58, %v894
    %v900 = vmul.bf16 %v59, %v894
    %v906 = vunpack.c.l.b16 %v896
    %v907 = vunpack.c.l.b16 %v897
    %v908 = vunpack.c.l.b16 %v898
    %v909 = vunpack.c.l.b16 %v899
    %v910 = vunpack.c.l.b16 %v900
    %v911 = vpack.c.b16 %v907, %v906
    %v912 = vpack.c.b16 %v909, %v908
    %v913 = vpack.c.b16 %v910, %v910
    %917 = vmatprep.subr.bf16.mxu0 %v177
    %918 = vmatpush1.bf16.msra.mxu0 %v176
    %919 = vmatprep.subr.bf16.mxu0 %v175
    %920 = vmatpush1.bf16.msra.mxu0 %v174
    %921 = vmatprep.subr.bf16.mxu0 %v173
    %922 = vmatpush1.bf16.msra.mxu0 %v172
    %923 = vmatprep.subr.bf16.mxu0 %v171
    %924 = vmatpush1.bf16.msra.mxu0 %v170
    %925 = vmatprep.subr.bf16.mxu0 %v169
    %926 = vmatpush1.bf16.msra.mxu0 %v168
    %927 = vmatprep.subr.bf16.mxu0 %v167
    %928 = vmatpush1.bf16.msra.mxu0 %v166
    %929 = vmatprep.subr.bf16.mxu0 %v165
    %930 = vmatpush1.bf16.msra.mxu0 %v164
    %931 = vmatprep.subr.bf16.mxu0 %v163
    %932 = vmatpush1.bf16.msra.mxu0 %v162
    %933 = vmatprep.subr.bf16.mxu0 0
    %934 = vmatpush2.bf16.msra.mxu0 0
    %935 = vmatprep.subr.bf16.mxu0 0
    %936 = vmatpush2.bf16.msra.mxu0 0
    %937 = vmatprep.subr.bf16.mxu0 0
    %938 = vmatpush2.bf16.msra.mxu0 0
    %939 = vmatprep.subr.bf16.mxu0 0
    %940 = vmatpush2.bf16.msra.mxu0 0
    %941 = vmatprep.subr.bf16.mxu0 0
    %942 = vmatpush2.bf16.msra.mxu0 0
    %943 = vmatprep.subr.bf16.mxu0 0
    %944 = vmatpush2.bf16.msra.mxu0 0
    %945 = vmatprep.subr.bf16.mxu0 0
    %946 = vmatpush2.bf16.msra.mxu0 0
    %947 = vmatprep.subr.bf16.mxu0 0
    %948 = vmatpush2.bf16.msra.mxu0 0
    %949 = vmatprep.mubr.bf16.mxu0 0
    %950 = vmatmul.mubr.bf16.gmra.mxu0 %v911
    %v951 = vpop.f32.mrf.mxu0
    %v952 = vadd.f32 0.0, %v951
    %v953 = vpop.f32.mrf.mxu0
    %v954 = vadd.f32 0.0, %v953
    %v955 = vpop.f32.mrf.mxu0
    %v956 = vadd.f32 0.0, %v955
    %v957 = vpop.f32.mrf.mxu0
    %v958 = vadd.f32 0.0, %v957
    %959 = vmatprep.mubr.bf16.mxu0 0
    %960 = vmatmul.mubr.bf16.gmra.mxu0 %v912
    %v961 = vpop.f32.mrf.mxu0
    %v962 = vadd.f32 0.0, %v961
    %v963 = vpop.f32.mrf.mxu0
    %v964 = vadd.f32 0.0, %v963
    %v965 = vpop.f32.mrf.mxu0
    %v966 = vadd.f32 0.0, %v965
    %v967 = vpop.f32.mrf.mxu0
    %v968 = vadd.f32 0.0, %v967
    %969 = vmatprep.mubr.bf16.mxu0 0
    %970 = vmatmul.mubr.bf16.gmra.mxu0 %v913
    %v971 = vpop.f32.mrf.mxu0
    %v972 = vadd.f32 0.0, %v971
    %v973 = vpop.f32.mrf.mxu0
    %v974 = vadd.f32 0.0, %v973
    %v975 = vpop.f32.mrf.mxu0
    %v976 = vpop.f32.mrf.mxu0
    %977 = vdwg.mxu0
    %v978 = vld [vmem:[#allocation2] sm:$0xff]
    %v979 = vld [vmem:[#allocation2 + $0x8] sm:$0xff]
    %v980 = vld [vmem:[#allocation2 + $0x10] sm:$0xff]
    %v981 = vld [vmem:[#allocation2 + $0x18] sm:$0xff]
    %v982 = vld [vmem:[#allocation2 + $0x20] sm:$0xff]
    %v983 = vmul.f32 %v952, %v952
    %v984 = vmul.f32 %v956, %v956
    %v985 = vmul.f32 %v962, %v962
    %v986 = vmul.f32 %v966, %v966
    %v987 = vmul.f32 %v972, %v972
    %v988 = vmul.f32 %v954, %v954
    %v989 = vmul.f32 %v958, %v958
    %v990 = vmul.f32 %v964, %v964
    %v991 = vmul.f32 %v968, %v968
    %v992 = vmul.f32 %v974, %v974
    %v993 = vadd.f32 %v983, %v988
    %v994 = vadd.f32 %v984, %v989
    %v995 = vadd.f32 %v985, %v990
    %v996 = vadd.f32 %v986, %v991
    %v997 = vadd.f32 %v987, %v992
    %v998 = vadd.f32 %v978, %v993
    %v999 = vadd.f32 %v979, %v994
    %v1000 = vadd.f32 %v980, %v995
    %v1001 = vadd.f32 %v981, %v996
    %v1002 = vadd.f32 %v982, %v997
    %1003 = vst [vmem:[#allocation2] sm:$0xff] %v998
    %1004 = vst [vmem:[#allocation2 + $0x8] sm:$0xff] %v999
    %1005 = vst [vmem:[#allocation2 + $0x10] sm:$0xff] %v1000
    %1006 = vst [vmem:[#allocation2 + $0x18] sm:$0xff] %v1001
    %1007 = vst [vmem:[#allocation2 + $0x20] sm:$0xff] %v1002
    %v1008 = vld [vmem:[#allocation2] sm:$0xff]
    %v1009 = vld [vmem:[#allocation2 + $0x8] sm:$0xff]
    %v1010 = vld [vmem:[#allocation2 + $0x10] sm:$0xff]
    %v1011 = vld [vmem:[#allocation2 + $0x18] sm:$0xff]
    %v1012 = vld [vmem:[#allocation2 + $0x20] sm:$0xff]
    %v1013 = vmul.f32 %v1008, 0.14285715
    %v1014 = vmul.f32 %v1009, 0.14285715
    %v1015 = vmul.f32 %v1010, 0.14285715
    %v1016 = vmul.f32 %v1011, 0.14285715
    %v1017 = vmul.f32 %v1012, 0.14285715
    %1018 = vst [vmem:[#allocation9] sm:$0xff] %v1013
    %1019 = vst [vmem:[#allocation9 + $0x8] sm:$0xff] %v1014
    %1020 = vst [vmem:[#allocation9 + $0x10] sm:$0xff] %v1015
    %1021 = vst [vmem:[#allocation9 + $0x18] sm:$0xff] %v1016
    %1022 = vst [vmem:[#allocation9 + $0x20] sm:$0xff] %v1017
    // Predicated region
    $region26: #{tpu_custom_call.1} parent=1 // pred_check
      _
    $region27: #{tpu_custom_call.1} parent=1 // pred_check_branch
      %1024 = sbr.rel (0) target = $region29
    $region28: #{tpu_custom_call.1} parent=1 // pred_region
      %s1026 = ssub.s32 640, 640
      %1027 = vsyncadd [#allocation5], %s1026
      %s1028 = sshll.u32 [#allocation9], 4
      %s1029 = int_to_ptr.vmem [resolvable:$true] %s1028
      %1034 = dma.vmem_to_hbm [thread:$0]  %s1029, 640, %s3, [#allocation5], 128, 128, 8
    $region29: #{tpu_custom_call.1} parent=1 // pred_fallthru
      _
    // Predicated region
    $region30: #{tpu_custom_call.1} parent=1 // pred_check
      _
    $region31: #{tpu_custom_call.1} parent=1 // pred_check_branch
      %1036 = sbr.rel (0) target = $region33
    $region32: #{tpu_custom_call.1} parent=1 // pred_region
      %1037 = dma.done [#allocation5], 640
    $region33: #{tpu_custom_call.1} parent=1 // pred_fallthru
      _
    %1038 = vsyncpa [#allocation4], 1
    %1039 = vsyncpa [#allocation7], 1
    %1040 = vsyncpa [#allocation5], 1

</llo_original>
